<compile_context>
chip_gen: v5e
topology: v5e:2x2
jax: 0.10.0
libtpu: 0.0.40
codegen_flags: <defaults>
</compile_context>

<pallas_src>
import jax
import jax.numpy as jnp
from jax import lax
from jax.experimental import pallas as pl
from jax.experimental.pallas import tpu as pltpu


# Sublane packing factor per element size (f32 -> 8, bf16 -> 16, int8/fp8 -> 32).
_SUBLANE_PACK = {4: 8, 2: 16, 1: 32}


def _round_up(n: int, m: int) -> int:
    return ((n + m - 1) // m) * m


def _vmem_cap_bytes() -> int:
    """~85% of this generation's physical VMEM (v7x-safe conservative fallback)."""
    cap = 64 * 2**20  # v7x worst case
    try:
        info = pltpu.get_tpu_info()
        cap = int(getattr(info, "vmem_capacity_bytes", cap))
    except Exception:
        pass
    return int(0.85 * cap)


def _rnn_seq_kernel(gi_ref, h0_ref, whh_t_ref, h_out_ref, h_carry):
    # gi_ref:    (TB, Bp, Hp) f32  precomputed x@W_ih^T + b_ih + b_hh (streamed)
    # h0_ref:    (Bp, Hp)     f32  initial hidden state (VMEM-resident, 1 buffer)
    # whh_t_ref: (Hp, Hp)          W_hh^T, padded       (VMEM-resident, 1 buffer)
    # h_out_ref: (TB, Bp, Hp)      hidden states emitted for this time block
    # h_carry:   (Bp, Hp)     f32  scratch carrying h across grid steps
    tb = pl.program_id(0)

    @pl.when(tb == 0)
    def _():
        h_carry[...] = h0_ref[...].astype(jnp.float32)

    w_hh_t = whh_t_ref[...]
    n_steps = gi_ref.shape[0]  # static TB

    def step(i, h_prev):
        # Recurrent matmul on the MXU with f32 accumulation.
        gh = jnp.dot(h_prev.astype(w_hh_t.dtype), w_hh_t,
                     preferred_element_type=jnp.float32)
        # f32 elementwise epilogue (tanh on the EUP); bias already folded into Gi.
        h_new = jnp.tanh(gi_ref[i] + gh)
        h_out_ref[i] = h_new.astype(h_out_ref.dtype)
        return h_new

    h_carry[...] = lax.fori_loop(0, n_steps, step, h_carry[...], unroll=True)


def prepare_rnn_cell_params(w_ih, w_hh, b_ih, b_hh, *, compute_dtype=jnp.float32):
    """One-time parameter prep.

    w_ih: (H, I), w_hh: (H, H), b_ih / b_hh: (H,).
    Only W_hh^T is padded/cast for the in-kernel recurrence; the input projection
    weight stays unpadded f32 because Gi is precomputed outside the recurrence.
    """
    H, I = w_ih.shape
    Hp = _round_up(H, 128)

    w_ih_t = jnp.transpose(w_ih).astype(jnp.float32)            # (I, H)
    bias = (b_ih + b_hh).astype(jnp.float32)                    # (H,)
    whh_t = jnp.zeros((Hp, Hp), compute_dtype)
    whh_t = whh_t.at[:H, :H].set(jnp.transpose(w_hh).astype(compute_dtype))

    return {
        "w_ih_t": w_ih_t, "bias": bias, "whh_t": whh_t,
        "input_size": I, "hidden_size": H, "Hp": Hp,
        "compute_dtype": jnp.dtype(compute_dtype),
    }


def rnn_sequence_forward(xs, h0, params, *, time_block=8, out_dtype=None):
    """Run the fused RNNCell kernel over a sequence.

    xs: (T, B, input_size), h0: (B, hidden_size) -> (T, B, hidden_size)
    """
    T, B, I = xs.shape
    H = params["hidden_size"]
    Hp = params["Hp"]
    assert I == params["input_size"] and h0.shape == (B, H)

    compute_dtype = params["compute_dtype"]
    out_dtype = jnp.dtype(out_dtype) if out_dtype is not None else jnp.dtype(h0.dtype)

    # Batch padded to the compute-dtype sublane pack -> full-vreg matmul operands.
    pack = _SUBLANE_PACK[compute_dtype.itemsize]
    Bp = _round_up(max(B, pack), pack)

    TB = max(1, min(int(time_block), T))
    Tp = _round_up(T, TB)
    n_blocks = Tp // TB

    # --- Hoisted input projection: one MXU-efficient batched matmul in XLA. ---
    gi = jnp.einsum("tbi,ih->tbh", xs.astype(jnp.float32), params["w_ih_t"])
    gi = gi + params["bias"]                                    # (T, B, H) f32
    gi_p = jnp.zeros((Tp, Bp, Hp), jnp.float32).at[:T, :B, :H].set(gi)
    h0_p = jnp.zeros((Bp, Hp), jnp.float32).at[:B, :H].set(h0.astype(jnp.float32))
    whh_t = params["whh_t"]

    # --- VMEM budget: single-buffered residents + double-buffered Gi/out + carry. ---
    c_sz = compute_dtype.itemsize
    o_sz = out_dtype.itemsize
    resident = Hp * Hp * c_sz + Bp * Hp * 4                     # W_hh^T + h0 (1 buf each)
    streamed = 2 * TB * Bp * Hp * 4 + 2 * TB * Bp * Hp * o_sz   # Gi + out (2 bufs each)
    scratch = Bp * Hp * 4                                       # f32 h carry
    vmem_bytes = int(1.5 * (resident + streamed + scratch)) + (2 << 20)
    vmem_bytes = max(vmem_bytes, 8 << 20)
    vmem_bytes = min(vmem_bytes, _vmem_cap_bytes())

    out = pl.pallas_call(
        _rnn_seq_kernel,
        out_shape=jax.ShapeDtypeStruct((Tp, Bp, Hp), out_dtype),
        grid=(n_blocks,),
        in_specs=[
            # Gi streams per time block (default double-buffered pipeline).
            pl.BlockSpec((TB, Bp, Hp), lambda t: (t, 0, 0)),
            # Constant block index -> VMEM-resident; no double-buffering needed.
            pl.BlockSpec((Bp, Hp), lambda t: (0, 0), pipeline_mode=pl.Buffered(1)),
            pl.BlockSpec((Hp, Hp), lambda t: (0, 0), pipeline_mode=pl.Buffered(1)),
        ],
        out_specs=pl.BlockSpec((TB, Bp, Hp), lambda t: (t, 0, 0)),
        scratch_shapes=[pltpu.VMEM((Bp, Hp), jnp.float32)],
        compiler_params=pltpu.CompilerParams(
            # Time axis is a recurrence -> sequential ("arbitrary").
            dimension_semantics=("arbitrary",),
            vmem_limit_bytes=vmem_bytes,
        ),
    )(gi_p, h0_p, whh_t)

    return out[:T, :B, :H]


def rnn_cell_forward(x, h, params):
    """Single RNNCell step (matches RNNCellModule.forward): (B, I), (B, H) -> (B, H)."""
    return rnn_sequence_forward(x[None, ...], h, params, time_block=1)[0]


if __name__ == "__main__":
    # Module hyperparameters (match the PyTorch script).
    batch_size = 1
    hidden_size = 4
    input_size = 4
    seq_len = 8  # for the fused-sequence demos

    key = jax.random.PRNGKey(0)
    k_x, k_xs, k_wih, k_whh, k_bih, k_bhh = jax.random.split(key, 6)

    bound = 1.0 / float(hidden_size) ** 0.5
    w_ih = jax.random.uniform(k_wih, (hidden_size, input_size), jnp.float32, -bound, bound)
    w_hh = jax.random.uniform(k_whh, (hidden_size, hidden_size), jnp.float32, -bound, bound)
    b_ih = jax.random.uniform(k_bih, (hidden_size,), jnp.float32, -bound, bound)
    b_hh = jax.random.uniform(k_bhh, (hidden_size,), jnp.float32, -bound, bound)

    x = jax.random.normal(k_x, (batch_size, input_size), jnp.float32)
    h0 = jnp.zeros((batch_size, hidden_size), jnp.float32)  # init_hidden()
    xs = jax.random.normal(k_xs, (seq_len, batch_size, input_size), jnp.float32)

    # --- 1) Single step, f32 (exact RNNCellModule.forward semantics) ---
    params_f32 = prepare_rnn_cell_params(w_ih, w_hh, b_ih, b_hh,
                                         compute_dtype=jnp.float32)
    h1 = rnn_cell_forward(x, h0, params_f32)
    jax.block_until_ready(h1)
    ref1 = jnp.tanh(x @ w_ih.T + b_ih + h0 @ w_hh.T + b_hh)
    assert h1.shape == (batch_size, hidden_size)
    assert jnp.allclose(h1, ref1, atol=1e-5, rtol=1e-5), (h1, ref1)

    # Pure-JAX reference scan over the sequence.
    def _step(h, x_t):
        h_new = jnp.tanh(x_t @ w_ih.T + b_ih + h @ w_hh.T + b_hh)
        return h_new, h_new

    _, hs_ref = jax.lax.scan(_step, h0, xs)

    # --- 2) Fused sequence, f32, time_block=3 (exercises T-padding + carry) ---
    hs_f32 = rnn_sequence_forward(xs, h0, params_f32, time_block=3)
    jax.block_until_ready(hs_f32)
    assert jnp.allclose(hs_f32, hs_ref, atol=1e-4, rtol=1e-4), (hs_f32, hs_ref)

    # --- 3) Fused sequence, bf16 recurrent weights + bf16 per-step output ---
    params_bf16 = prepare_rnn_cell_params(w_ih, w_hh, b_ih, b_hh,
                                          compute_dtype=jnp.bfloat16)
    hs_bf16 = rnn_sequence_forward(xs, h0, params_bf16, time_block=4,
                                   out_dtype=jnp.bfloat16)
    jax.block_until_ready(hs_bf16)
    assert jnp.allclose(hs_bf16.astype(jnp.float32), hs_ref, atol=5e-2, rtol=5e-2), (
        hs_bf16, hs_ref)

    print("KERNEL_OK")
</pallas_src>

<mosaic_0001>
module attributes {stable_mosaic.version = 11 : i64} {
  func.func @_rnn_seq_kernel(%arg0: i32, %arg1: memref<1x8x128xf32, #tpu.memory_space<vmem>>, %arg2: memref<8x128xf32, #tpu.memory_space<vmem>>, %arg3: memref<128x128xf32, #tpu.memory_space<vmem>>, %arg4: memref<1x8x128xf32, #tpu.memory_space<vmem>>, %arg5: memref<8x128xf32, #tpu.memory_space<vmem>>) attributes {dimension_semantics = [#tpu.dimension_semantics<arbitrary>], iteration_bounds = array<i64: 1>, scalar_prefetch = 0 : i64, scratch_operands = 1 : i64, tpu.core_type = #tpu.core_type<tc>, window_params = [{transform_indices = @transform_0, window_bounds = array<i64: 1, 8, 128>}, {pipeline_mode = #tpu.pipeline_mode<synchronous>, transform_indices = @transform_1, window_bounds = array<i64: 8, 128>}, {pipeline_mode = #tpu.pipeline_mode<synchronous>, transform_indices = @transform_2, window_bounds = array<i64: 128, 128>}, {transform_indices = @transform_3, window_bounds = array<i64: 1, 8, 128>}]} {
    %c0_i32 = arith.constant 0 : i32
    %0 = arith.cmpi eq, %arg0, %c0_i32 : i32
    %1 = arith.extui %0 : i1 to i32
    %c0_i32_0 = arith.constant 0 : i32
    %2 = arith.cmpi ne, %1, %c0_i32_0 : i32
    scf.if %2 {
      %c0_11 = arith.constant 0 : index
      %c0_12 = arith.constant 0 : index
      %16 = vector.load %arg2[%c0_11, %c0_12] : memref<8x128xf32, #tpu.memory_space<vmem>>, vector<8x128xf32>
      %c0_13 = arith.constant 0 : index
      %c0_14 = arith.constant 0 : index
      %17 = vector.load %arg5[%c0_13, %c0_14] : memref<8x128xf32, #tpu.memory_space<vmem>>, vector<8x128xf32>
      tpu.vector_store %arg5[%c0_13, %c0_14], %16 {strides = array<i32>} : memref<8x128xf32, #tpu.memory_space<vmem>>, vector<8x128xf32>,
    } else {
    }
    %c0 = arith.constant 0 : index
    %c0_1 = arith.constant 0 : index
    %3 = vector.load %arg3[%c0, %c0_1] : memref<128x128xf32, #tpu.memory_space<vmem>>, vector<128x128xf32>
    %c0_2 = arith.constant 0 : index
    %c0_3 = arith.constant 0 : index
    %4 = vector.load %arg5[%c0_2, %c0_3] : memref<8x128xf32, #tpu.memory_space<vmem>>, vector<8x128xf32>
    %c0_i32_4 = arith.constant 0 : i32
    %cst = arith.constant dense<0.000000e+00> : vector<8x128xf32>
    %5 = tpu.matmul %4, %3, %cst {dimension_numbers = #tpu.dot_dimension_numbers<[1], [0], [0], [1], [0, 0, 1, 1], [], []>} : vector<8x128xf32>, vector<128x128xf32>, vector<8x128xf32> -> vector<8x128xf32>
    %6 = arith.index_cast %c0_i32_4 : i32 to index
    %c0_5 = arith.constant 0 : index
    %c0_6 = arith.constant 0 : index
    %7 = vector.load %arg1[%6, %c0_5, %c0_6] : memref<1x8x128xf32, #tpu.memory_space<vmem>>, vector<1x8x128xf32>
    %8 = vector.shape_cast %7 : vector<1x8x128xf32> to vector<8x128xf32>
    %9 = arith.addf %8, %5 : vector<8x128xf32>
    %10 = math.tanh %9 : vector<8x128xf32>
    %11 = arith.index_cast %c0_i32_4 : i32 to index
    %c0_7 = arith.constant 0 : index
    %c0_8 = arith.constant 0 : index
    %12 = vector.load %arg4[%11, %c0_7, %c0_8] : memref<1x8x128xf32, #tpu.memory_space<vmem>>, vector<1x8x128xf32>
    %13 = vector.shape_cast %12 : vector<1x8x128xf32> to vector<8x128xf32>
    %14 = vector.shape_cast %10 : vector<8x128xf32> to vector<1x8x128xf32>
    tpu.vector_store %arg4[%11, %c0_7, %c0_8], %14 {strides = array<i32>} : memref<1x8x128xf32, #tpu.memory_space<vmem>>, vector<1x8x128xf32>,
    %c1_i32 = arith.constant 1 : i32
    %c0_9 = arith.constant 0 : index
    %c0_10 = arith.constant 0 : index
    %15 = vector.load %arg5[%c0_9, %c0_10] : memref<8x128xf32, #tpu.memory_space<vmem>>, vector<8x128xf32>
    tpu.vector_store %arg5[%c0_9, %c0_10], %10 {strides = array<i32>} : memref<8x128xf32, #tpu.memory_space<vmem>>, vector<8x128xf32>,
    return
  }
  func.func @transform_0(%arg0: i32) -> (i32, i32, i32) {
    %c0_i32 = arith.constant 0 : i32
    %c0_i32_0 = arith.constant 0 : i32
    %c0_i32_1 = arith.constant 0 : i32
    return %arg0, %c0_i32, %c0_i32_0 : i32, i32, i32
  }
  func.func @transform_1(%arg0: i32) -> (i32, i32) {
    %c0_i32 = arith.constant 0 : i32
    %c0_i32_0 = arith.constant 0 : i32
    %c0_i32_1 = arith.constant 0 : i32
    return %c0_i32, %c0_i32_0 : i32, i32
  }
  func.func @transform_2(%arg0: i32) -> (i32, i32) {
    %c0_i32 = arith.constant 0 : i32
    %c0_i32_0 = arith.constant 0 : i32
    %c0_i32_1 = arith.constant 0 : i32
    return %c0_i32, %c0_i32_0 : i32, i32
  }
  func.func @transform_3(%arg0: i32) -> (i32, i32, i32) {
    %c0_i32 = arith.constant 0 : i32
    %c0_i32_0 = arith.constant 0 : i32
    %c0_i32_1 = arith.constant 0 : i32
    return %arg0, %c0_i32, %c0_i32_0 : i32, i32, i32
  }
}

</mosaic_0001>

<llo_original>
// kernel: tpu_custom_call.1
$region0: #{tpu_custom_call.1}
  #allocation0 [shape = 'u32[]', space=smem, size = 0x4, offset = 0x4, fixed_abs, tag = 'smem constant byte address 0x4 - core index']
  #allocation1 [shape = 'u32[72,128]{1,0:T(1,128)}', space=vmem, size = 0x9000, scoped, tag = 'internal scratch']
  #allocation2 [shape = 'f32[8,128]{1,0:T(8,128)}', space=vmem, size = 0x1000, scoped, tag = 'scratch operand']
  %s0 = inlined_call_operand.hbm [shape: f32[1,8,128], index: 0, kind: input, shape index: {}]
  %s1 = inlined_call_operand.hbm [shape: f32[8,128], index: 1, kind: input, shape index: {}]
  %s2 = inlined_call_operand.hbm [shape: f32[128,128], index: 2, kind: input, shape index: {}]
  %s3 = inlined_call_operand.hbm [shape: f32[1,8,128], index: 3, kind: output, shape index: {}]
  %s4 = sld [smem:[#allocation0]]
  $region38: #{tpu_custom_call.1} parent=0
    _
  %s6 = ssub.s32 1, %s4
  %s7 = scalar_select 0, %s6, %s4
  $region1: #{tpu_custom_call.1} parent=0
    #allocation3 [shape = 'u8[4096]{0}', space=vmem, size = 0x1000, scoped, tag = 'input window, operand 0, single buffered']
    #allocation4 [shape = 's32[1]{0}', space=sflag, size = 0x4, scoped, tag = 'scoped memory for tpu_custom_call.1']
    #allocation5 [shape = 's32[1]{0}', space=sflag, size = 0x4, scoped, tag = 'scoped memory for tpu_custom_call.1']
    #allocation6 [shape = 'u8[4096]{0}', space=vmem, size = 0x1000, scoped, tag = 'input window, operand 1, single buffered']
    #allocation7 [shape = 's32[1]{0}', space=sflag, size = 0x4, scoped, tag = 'scoped memory for tpu_custom_call.1']
    #allocation8 [shape = 'u8[65536]{0}', space=vmem, size = 0x10000, scoped, tag = 'input window, operand 2, single buffered']
    #allocation9 [shape = 'u8[4096]{0}', space=vmem, size = 0x1000, scoped, tag = 'output window, operand 0, single buffered']
    %8 = vsyncpa [#allocation4], 0
    %9 = vsyncpa [#allocation7], 0
    %10 = vsyncpa [#allocation5], 0
    // Predicated region
    $region2: #{tpu_custom_call.1} parent=1 // pred_check
      _
    $region3: #{tpu_custom_call.1} parent=1 // pred_check_branch
      %12 = sbr.rel (0) target = $region5
    $region4: #{tpu_custom_call.1} parent=1 // pred_region
      %14 = vsyncadd [#allocation4], 0
      %s16 = sshll.u32 %s0, 4
      %s17 = int_to_ptr.hbm [resolvable:$true] %s16
      %s18 = sshll.u32 [#allocation3], 4
      %s19 = int_to_ptr.vmem [resolvable:$true] %s18
      %21 = dma.hbm_to_vmem [thread:$0]  %s17, 128, %s19, [#allocation4]
    $region5: #{tpu_custom_call.1} parent=1 // pred_fallthru
      _
    // Predicated region
    $region6: #{tpu_custom_call.1} parent=1 // pred_check
      _
    $region7: #{tpu_custom_call.1} parent=1 // pred_check_branch
      %23 = sbr.rel (0) target = $region9
    $region8: #{tpu_custom_call.1} parent=1 // pred_region
      %25 = vsyncadd [#allocation7], 0
      %s27 = sshll.u32 %s1, 4
      %s28 = int_to_ptr.hbm [resolvable:$true] %s27
      %s29 = sshll.u32 [#allocation6], 4
      %s30 = int_to_ptr.vmem [resolvable:$true] %s29
      %32 = dma.hbm_to_vmem [thread:$0]  %s28, 128, %s30, [#allocation7]
    $region9: #{tpu_custom_call.1} parent=1 // pred_fallthru
      _
    // Predicated region
    $region10: #{tpu_custom_call.1} parent=1 // pred_check
      _
    $region11: #{tpu_custom_call.1} parent=1 // pred_check_branch
      %34 = sbr.rel (0) target = $region13
    $region12: #{tpu_custom_call.1} parent=1 // pred_region
      %36 = vsyncadd [#allocation7], 0
      %s37 = sshll.u32 %s2, 4
      %s38 = int_to_ptr.hbm [resolvable:$true] %s37
      %s39 = sshll.u32 [#allocation8], 4
      %s40 = int_to_ptr.vmem [resolvable:$true] %s39
      %45 = dma.hbm_to_vmem [thread:$0]  %s38, 2048, %s40, [#allocation7], 128, 128, 8
    $region13: #{tpu_custom_call.1} parent=1 // pred_fallthru
      _
    // Predicated region
    $region14: #{tpu_custom_call.1} parent=1 // pred_check
      _
    $region15: #{tpu_custom_call.1} parent=1 // pred_check_branch
      %47 = sbr.rel (0) target = $region17
    $region16: #{tpu_custom_call.1} parent=1 // pred_region
      %49 = dma.done [#allocation4], 128
    $region17: #{tpu_custom_call.1} parent=1 // pred_fallthru
      _
    // Predicated region
    $region18: #{tpu_custom_call.1} parent=1 // pred_check
      _
    $region19: #{tpu_custom_call.1} parent=1 // pred_check_branch
      %51 = sbr.rel (0) target = $region21
    $region20: #{tpu_custom_call.1} parent=1 // pred_region
      %53 = dma.done [#allocation7], 128
    $region21: #{tpu_custom_call.1} parent=1 // pred_fallthru
      _
    // Predicated region
    $region22: #{tpu_custom_call.1} parent=1 // pred_check
      _
    $region23: #{tpu_custom_call.1} parent=1 // pred_check_branch
      %55 = sbr.rel (0) target = $region25
    $region24: #{tpu_custom_call.1} parent=1 // pred_region
      %57 = dma.done [#allocation7], 2048
    $region25: #{tpu_custom_call.1} parent=1 // pred_fallthru
      _
    %p58 = scmp.eq.s32.totalorder 0, 0
    // Predicated region
    $region26: #{tpu_custom_call.1} parent=1 // pred_check
      %p59 = pneg %p58
    $region27: #{tpu_custom_call.1} parent=1 // pred_check_branch
      %61 = sbr.rel (%p59) target = $region29
    $region28: #{tpu_custom_call.1} parent=1 // pred_region
      %v62 = vld [vmem:[#allocation6] sm:$0xff]
      %63 = vst [vmem:[#allocation2] sm:$0xff] %v62
    $region29: #{tpu_custom_call.1} parent=1 // pred_fallthru
      _
    %v64 = vld [vmem:[#allocation8] sm:$0xff]
    %v65 = vld [vmem:[#allocation8 + $0x8] sm:$0xff]
    %v66 = vld [vmem:[#allocation8 + $0x10] sm:$0xff]
    %v67 = vld [vmem:[#allocation8 + $0x18] sm:$0xff]
    %v68 = vld [vmem:[#allocation8 + $0x20] sm:$0xff]
    %v69 = vld [vmem:[#allocation8 + $0x28] sm:$0xff]
    %v70 = vld [vmem:[#allocation8 + $0x30] sm:$0xff]
    %v71 = vld [vmem:[#allocation8 + $0x38] sm:$0xff]
    %v72 = vld [vmem:[#allocation8 + $0x40] sm:$0xff]
    %v73 = vld [vmem:[#allocation8 + $0x48] sm:$0xff]
    %v74 = vld [vmem:[#allocation8 + $0x50] sm:$0xff]
    %v75 = vld [vmem:[#allocation8 + $0x58] sm:$0xff]
    %v76 = vld [vmem:[#allocation8 + $0x60] sm:$0xff]
    %v77 = vld [vmem:[#allocation8 + $0x68] sm:$0xff]
    %v78 = vld [vmem:[#allocation8 + $0x70] sm:$0xff]
    %v79 = vld [vmem:[#allocation8 + $0x78] sm:$0xff]
    %v80 = vld [vmem:[#allocation2] sm:$0xff]
    %81 = vmatpush.msra.mxu0 %v79
    %82 = vmatpush.msra.mxu0 %v78
    %83 = vmatpush.msra.mxu0 %v77
    %84 = vmatpush.msra.mxu0 %v76
    %85 = vmatpush.msra.mxu0 %v75
    %86 = vmatpush.msra.mxu0 %v74
    %87 = vmatpush.msra.mxu0 %v73
    %88 = vmatpush.msra.mxu0 %v72
    %89 = vmatpush.msra.mxu0 %v71
    %90 = vmatpush.msra.mxu0 %v70
    %91 = vmatpush.msra.mxu0 %v69
    %92 = vmatpush.msra.mxu0 %v68
    %93 = vmatpush.msra.mxu0 %v67
    %94 = vmatpush.msra.mxu0 %v66
    %95 = vmatpush.msra.mxu0 %v65
    %96 = vmatpush.msra.mxu0 %v64
    %97 = vmatmul.f32.gmra.mxu0 %v80
    %v98 = vpop.f32.mrf.mxu0
    %v99 = vadd.f32 0.0, %v98
    %100 = vdwg.mxu0
    %v101 = vld [vmem:[#allocation3] sm:$0xff]
    %v102 = vadd.f32 %v101, %v99
    %v103 = vtanh.pop %v102
    %104 = vst [vmem:[#allocation9] sm:$0xff] %v103
    %105 = vst [vmem:[#allocation2] sm:$0xff] %v103
    // Predicated region
    $region30: #{tpu_custom_call.1} parent=1 // pred_check
      _
    $region31: #{tpu_custom_call.1} parent=1 // pred_check_branch
      %107 = sbr.rel (0) target = $region33
    $region32: #{tpu_custom_call.1} parent=1 // pred_region
      %109 = vsyncadd [#allocation5], 0
      %s111 = sshll.u32 [#allocation9], 4
      %s112 = int_to_ptr.vmem [resolvable:$true] %s111
      %s113 = sshll.u32 %s3, 4
      %s114 = int_to_ptr.hbm [resolvable:$true] %s113
      %116 = dma.vmem_to_hbm [thread:$0]  %s112, 128, %s114, [#allocation5]
    $region33: #{tpu_custom_call.1} parent=1 // pred_fallthru
      _
    // Predicated region
    $region34: #{tpu_custom_call.1} parent=1 // pred_check
      _
    $region35: #{tpu_custom_call.1} parent=1 // pred_check_branch
      %118 = sbr.rel (0) target = $region37
    $region36: #{tpu_custom_call.1} parent=1 // pred_region
      %120 = dma.done [#allocation5], 128
    $region37: #{tpu_custom_call.1} parent=1 // pred_fallthru
      _
    %121 = vsyncpa [#allocation4], 1
    %122 = vsyncpa [#allocation7], 1
    %123 = vsyncpa [#allocation5], 1

</llo_original>
